<compile_context>
chip_gen: v7x
topology: tpu7x:2x2x1
jax: 0.10.0
libtpu: 0.0.40
codegen_flags: <defaults>
</compile_context>

<pallas_src>
import math

import jax
import jax.numpy as jnp
from jax.experimental import pallas as pl
from jax.experimental.pallas import tpu as pltpu


def _round_up(x, m):
    return ((x + m - 1) // m) * m


def _cdiv(a, b):
    return (a + b - 1) // b


_VMEM_LIMIT_BYTES = 40 * 1024 * 1024      # < v7x 64 MiB physical; > 16/32 MiB scoped defaults
_VMEM_HEADROOM_BYTES = 6 * 1024 * 1024    # compiler scratch / multipass temporaries
_TILE_N_CAP = 1024                        # mem-bound kernels hit ~85% HBM roofline by 512-1024 rows
_MIN_N_STEPS = 8                          # >= 4 grid steps per TensorCore on v7x megacore
_MAX_RESIDENT_W_BYTES = 8 * 1024 * 1024   # above this, stream W_big in FF tiles


def _make_kernel(tanh_dtype):
    def kernel(h_ref, w_ref, b_ref, out_ref):
        # h_ref:   (tile_n, D)        node-feature tile
        # w_ref:   (D, tile_ff)       fused weight tile: W_big[d, i*F+j] = W_l[d,j] + W_r[d,i]
        # b_ref:   (1, tile_ff)       expanded bias tile: b_big[0, i*F+j] = b[0,j]
        # out_ref: (tile_n, tile_ff)  lane-dense gate tile
        gate = jnp.dot(h_ref[...], w_ref[...], preferred_element_type=jnp.float32)
        gate = gate + b_ref[...]
        out_ref[...] = jnp.tanh(gate.astype(tanh_dtype)).astype(out_ref.dtype)

    return kernel


def _default_compute_dtype():
    """bf16 dot inputs / bf16 tanh on v6e/v7x (bf16 EUP; no-f32 MXU on v7x);
    f32 on v5e and older (no bf16 VPU/EUP) or when the generation is unknown."""
    try:
        kind = jax.devices()[0].device_kind.lower()
    except Exception:
        return jnp.float32
    if "v6" in kind or "v7" in kind:
        return jnp.bfloat16
    return jnp.float32


def _pick_tiles(n, d, ff128, in_itemsize, out_itemsize):
    """Choose (tile_n, tile_ff, ff_pad) under a conservative VMEM budget."""
    budget = _VMEM_LIMIT_BYTES - _VMEM_HEADROOM_BYTES

    # --- FF axis: keep W_big resident when small, else stream 128-multiple column tiles.
    w_col_bytes = max(d * in_itemsize, 1)
    if ff128 * w_col_bytes <= _MAX_RESIDENT_W_BYTES:
        tile_ff = ff128
        ff_pad = ff128
    else:
        tile_ff = max(128, (_MAX_RESIDENT_W_BYTES // w_col_bytes) // 128 * 128)
        tile_ff = min(tile_ff, ff128)
        ff_pad = _round_up(ff128, tile_ff)

    # --- N axis: size against remaining VMEM (assume double-buffered W/b to be safe),
    #     cap at _TILE_N_CAP rows, then shrink so the grid has >= _MIN_N_STEPS steps
    #     along N when there is enough work.
    resident = 2 * (d * tile_ff * in_itemsize) + 2 * (tile_ff * 4)
    rem = max(budget - resident, 0)
    per_row = 2 * (d * in_itemsize) + 2 * (tile_ff * out_itemsize)  # dbl-buffered h + out rows
    tile_n = max(8, (rem // max(per_row, 1)) // 8 * 8)
    tile_n = min(tile_n, _TILE_N_CAP)

    n_pad8 = _round_up(max(n, 1), 8)
    if n_pad8 >= _MIN_N_STEPS * 8:
        tile_n = min(tile_n, _round_up(_cdiv(n_pad8, _MIN_N_STEPS), 8))
    tile_n = max(8, min(tile_n, n_pad8))
    return tile_n, tile_ff, ff_pad


def attribute_gate(h, W, b, *, out_dtype=jnp.bfloat16, compute_dtype=None, tile_n=None):
    """h: (N, D); W: (2D, F); b: (1, F) -> tanh(L[:,None,:] + R[:,:,None] + b), (N, F, F)."""
    N, D = h.shape
    two_d, F = W.shape
    assert two_d == 2 * D
    FF = F * F

    if compute_dtype is None:
        compute_dtype = _default_compute_dtype()
    in_itemsize = jnp.dtype(compute_dtype).itemsize
    out_itemsize = jnp.dtype(out_dtype).itemsize
    # bf16 tanh only when both the compute path and output are bf16 (v6e/v7x);
    # keep f32 tanh otherwise (v5e has no bf16 EUP).
    use_bf16 = jnp.dtype(compute_dtype) == jnp.dtype(jnp.bfloat16)
    tanh_dtype = jnp.bfloat16 if (use_bf16 and out_itemsize <= 2) else jnp.float32

    # Algebraic fusion of both matmuls + broadcast + bias into one affine map.
    W_l = W[:D, :].astype(jnp.float32)
    W_r = W[D:, :].astype(jnp.float32)
    W_big = (W_r[:, :, None] + W_l[:, None, :]).reshape(D, FF)          # (D, F*F)
    b_big = jnp.tile(b.reshape(1, F).astype(jnp.float32), (1, F))       # (1, F*F)

    ff128 = _round_up(FF, 128)  # lane-dense output (avoids masked vst on v5e)
    auto_tile_n, tile_ff, ff_pad = _pick_tiles(N, D, ff128, in_itemsize, out_itemsize)
    tile_n = auto_tile_n if tile_n is None else max(8, _round_up(tile_n, 8))

    if ff_pad != FF:
        W_big = jnp.pad(W_big, ((0, 0), (0, ff_pad - FF)))
        b_big = jnp.pad(b_big, ((0, 0), (0, ff_pad - FF)))

    # cdiv + zero-padding along N instead of asserting divisibility.
    n_pad = _round_up(max(N, 1), tile_n)
    if n_pad != N:
        h = jnp.concatenate([h, jnp.zeros((n_pad - N, D), h.dtype)], axis=0)

    h = h.astype(compute_dtype)
    W_big = W_big.astype(compute_dtype)

    n_steps = n_pad // tile_n
    ff_steps = ff_pad // tile_ff
    grid = (n_steps, ff_steps)

    cost = pl.CostEstimate(
        flops=2 * n_pad * D * ff_pad + n_pad * ff_pad,
        transcendentals=n_pad * ff_pad,
        bytes_accessed=(in_itemsize * (n_pad * D + n_steps * D * ff_pad)
                        + 4 * ff_pad
                        + out_itemsize * n_pad * ff_pad),
    )

    kernel = _make_kernel(tanh_dtype)
    out_shape = jax.ShapeDtypeStruct((n_pad, ff_pad), out_dtype)

    def build(single_buffer_w):
        if single_buffer_w and ff_steps == 1:
            # Grid-invariant operands: single-buffer to stop wasting VMEM on a
            # second copy that is never used.
            w_spec = pl.BlockSpec((D, tile_ff), lambda i, j: (0, 0),
                                  pipeline_mode=pl.Buffered(1))
            b_spec = pl.BlockSpec((1, tile_ff), lambda i, j: (0, 0),
                                  pipeline_mode=pl.Buffered(1))
        else:
            w_spec = pl.BlockSpec((D, tile_ff), lambda i, j: (0, j))
            b_spec = pl.BlockSpec((1, tile_ff), lambda i, j: (0, j))
        return pl.pallas_call(
            kernel,
            out_shape=out_shape,
            grid_spec=pltpu.PrefetchScalarGridSpec(
                num_scalar_prefetch=0,
                grid=grid,
                in_specs=[
                    pl.BlockSpec((tile_n, D), lambda i, j: (i, 0)),   # h tile
                    w_spec,                                           # W_big tile
                    b_spec,                                           # b_big tile
                ],
                out_specs=pl.BlockSpec((tile_n, tile_ff), lambda i, j: (i, j)),
            ),
            compiler_params=pltpu.CompilerParams(
                dimension_semantics=("parallel", "parallel"),
                vmem_limit_bytes=_VMEM_LIMIT_BYTES,
            ),
            cost_estimate=cost,
        )

    try:
        out2d = build(single_buffer_w=True)(h, W_big, b_big)
    except Exception:
        # Fallback for environments where pl.Buffered(1) is not accepted.
        out2d = build(single_buffer_w=False)(h, W_big, b_big)

    # TODO(synk): training-mode dropout omitted (identity at inference).
    return out2d[:N, :FF].reshape(N, F, F)


def _xavier_uniform(key, shape):
    # PyTorch xavier_uniform_ on a 2-D tensor: fan_in = shape[1], fan_out = shape[0]
    fan_in, fan_out = shape[1], shape[0]
    bound = math.sqrt(6.0 / (fan_in + fan_out))
    return jax.random.uniform(key, shape, jnp.float32, minval=-bound, maxval=bound)


def _reference(h, W, b):
    D = h.shape[1]
    input_l = h @ W[:D, :]
    input_r = h @ W[D:, :]
    gate = input_l[:, None, :] + input_r[:, :, None] + b  # (N, F, F) + (1, F)
    return jnp.tanh(gate)


if __name__ == "__main__":
    in_features = 16
    out_features = 32
    N = 8  # number of nodes

    key = jax.random.PRNGKey(0)
    k_h, k_w, k_b = jax.random.split(key, 3)

    h = jax.random.normal(k_h, (N, in_features), jnp.float32)
    W = _xavier_uniform(k_w, (2 * in_features, out_features))
    b = _xavier_uniform(k_b, (1, out_features))

    out = attribute_gate(h, W, b)
    out = jax.block_until_ready(out)

    ref = _reference(h, W, b)
    assert out.shape == (N, out_features, out_features)
    # Tolerance covers the bf16 output (and, on v6e/v7x, bf16 dot-input / bf16 tanh)
    # path on a tanh-bounded [-1, 1] output; the f32 path differs only at ~1e-6.
    assert jnp.allclose(out.astype(jnp.float32), ref, atol=3e-2, rtol=3e-2), \
        "mismatch vs reference"

    print("KERNEL_OK")
</pallas_src>

<mosaic_0001>
module attributes {stable_mosaic.version = 11 : i64} {
  func.func @kernel(%arg0: i32, %arg1: i32, %arg2: memref<8x16xf32, #tpu.memory_space<vmem>>, %arg3: memref<16x1024xf32, #tpu.memory_space<vmem>>, %arg4: memref<1x1024xf32, #tpu.memory_space<vmem>>, %arg5: memref<8x1024xbf16, #tpu.memory_space<vmem>>) attributes {dimension_semantics = [#tpu.dimension_semantics<parallel>, #tpu.dimension_semantics<parallel>], iteration_bounds = array<i64: 1, 1>, scalar_prefetch = 0 : i64, scratch_operands = 0 : i64, tpu.core_type = #tpu.core_type<tc>, window_params = [{transform_indices = @transform_0, window_bounds = array<i64: 8, 16>}, {pipeline_mode = #tpu.pipeline_mode<synchronous>, transform_indices = @transform_1, window_bounds = array<i64: 16, 1024>}, {pipeline_mode = #tpu.pipeline_mode<synchronous>, transform_indices = @transform_2, window_bounds = array<i64: 1, 1024>}, {transform_indices = @transform_3, window_bounds = array<i64: 8, 1024>}]} {
    %c0 = arith.constant 0 : index
    %c0_0 = arith.constant 0 : index
    %0 = vector.load %arg2[%c0, %c0_0] : memref<8x16xf32, #tpu.memory_space<vmem>>, vector<8x16xf32>
    %c0_1 = arith.constant 0 : index
    %c0_2 = arith.constant 0 : index
    %1 = vector.load %arg3[%c0_1, %c0_2] : memref<16x1024xf32, #tpu.memory_space<vmem>>, vector<16x1024xf32>
    %cst = arith.constant dense<0.000000e+00> : vector<8x1024xf32>
    %2 = tpu.matmul %0, %1, %cst {dimension_numbers = #tpu.dot_dimension_numbers<[1], [0], [0], [1], [0, 0, 1, 1], [], []>} : vector<8x16xf32>, vector<16x1024xf32>, vector<8x1024xf32> -> vector<8x1024xf32>
    %c0_3 = arith.constant 0 : index
    %c0_4 = arith.constant 0 : index
    %3 = vector.load %arg4[%c0_3, %c0_4] : memref<1x1024xf32, #tpu.memory_space<vmem>>, vector<1x1024xf32>
    %4 = vector.broadcast %3 : vector<1x1024xf32> to vector<8x1024xf32>
    %5 = arith.addf %2, %4 : vector<8x1024xf32>
    %6 = math.tanh %5 : vector<8x1024xf32>
    %7 = arith.truncf %6 : vector<8x1024xf32> to vector<8x1024xbf16>
    %c0_5 = arith.constant 0 : index
    %c0_6 = arith.constant 0 : index
    %8 = vector.load %arg5[%c0_5, %c0_6] : memref<8x1024xbf16, #tpu.memory_space<vmem>>, vector<8x1024xbf16>
    tpu.vector_store %arg5[%c0_5, %c0_6], %7 {strides = array<i32>} : memref<8x1024xbf16, #tpu.memory_space<vmem>>, vector<8x1024xbf16>,
    return
  }
  func.func @transform_0(%arg0: i32, %arg1: i32) -> (i32, i32) {
    %c0_i32 = arith.constant 0 : i32
    %c0_i32_0 = arith.constant 0 : i32
    return %arg0, %c0_i32 : i32, i32
  }
  func.func @transform_1(%arg0: i32, %arg1: i32) -> (i32, i32) {
    %c0_i32 = arith.constant 0 : i32
    %c0_i32_0 = arith.constant 0 : i32
    %c0_i32_1 = arith.constant 0 : i32
    return %c0_i32, %c0_i32_0 : i32, i32
  }
  func.func @transform_2(%arg0: i32, %arg1: i32) -> (i32, i32) {
    %c0_i32 = arith.constant 0 : i32
    %c0_i32_0 = arith.constant 0 : i32
    %c0_i32_1 = arith.constant 0 : i32
    return %c0_i32, %c0_i32_0 : i32, i32
  }
  func.func @transform_3(%arg0: i32, %arg1: i32) -> (i32, i32) {
    %c0_i32 = arith.constant 0 : i32
    return %arg0, %arg1 : i32, i32
  }
}

module attributes {stable_mosaic.version = 11 : i64} {
  func.func @kernel(%arg0: i32, %arg1: i32, %arg2: memref<8x16xf32, #tpu.memory_space<vmem>>, %arg3: memref<16x1024xf32, #tpu.memory_space<vmem>>, %arg4: memref<1x1024xf32, #tpu.memory_space<vmem>>, %arg5: memref<8x1024xbf16, #tpu.memory_space<vmem>>) attributes {dimension_semantics = [#tpu.dimension_semantics<parallel>, #tpu.dimension_semantics<parallel>], iteration_bounds = array<i64: 1, 1>, scalar_prefetch = 0 : i64, scratch_operands = 0 : i64, tpu.core_type = #tpu.core_type<tc>, window_params = [{transform_indices = @transform_0, window_bounds = array<i64: 8, 16>}, {transform_indices = @transform_1, window_bounds = array<i64: 16, 1024>}, {transform_indices = @transform_2, window_bounds = array<i64: 1, 1024>}, {transform_indices = @transform_3, window_bounds = array<i64: 8, 1024>}]} {
    %c0 = arith.constant 0 : index
    %c0_0 = arith.constant 0 : index
    %0 = vector.load %arg2[%c0, %c0_0] : memref<8x16xf32, #tpu.memory_space<vmem>>, vector<8x16xf32>
    %c0_1 = arith.constant 0 : index
    %c0_2 = arith.constant 0 : index
    %1 = vector.load %arg3[%c0_1, %c0_2] : memref<16x1024xf32, #tpu.memory_space<vmem>>, vector<16x1024xf32>
    %cst = arith.constant dense<0.000000e+00> : vector<8x1024xf32>
    %2 = tpu.matmul %0, %1, %cst {dimension_numbers = #tpu.dot_dimension_numbers<[1], [0], [0], [1], [0, 0, 1, 1], [], []>} : vector<8x16xf32>, vector<16x1024xf32>, vector<8x1024xf32> -> vector<8x1024xf32>
    %c0_3 = arith.constant 0 : index
    %c0_4 = arith.constant 0 : index
    %3 = vector.load %arg4[%c0_3, %c0_4] : memref<1x1024xf32, #tpu.memory_space<vmem>>, vector<1x1024xf32>
    %4 = vector.broadcast %3 : vector<1x1024xf32> to vector<8x1024xf32>
    %5 = arith.addf %2, %4 : vector<8x1024xf32>
    %6 = math.tanh %5 : vector<8x1024xf32>
    %7 = arith.truncf %6 : vector<8x1024xf32> to vector<8x1024xbf16>
    %c0_5 = arith.constant 0 : index
    %c0_6 = arith.constant 0 : index
    %8 = vector.load %arg5[%c0_5, %c0_6] : memref<8x1024xbf16, #tpu.memory_space<vmem>>, vector<8x1024xbf16>
    tpu.vector_store %arg5[%c0_5, %c0_6], %7 {strides = array<i32>} : memref<8x1024xbf16, #tpu.memory_space<vmem>>, vector<8x1024xbf16>,
    return
  }
  func.func @transform_0(%arg0: i32, %arg1: i32) -> (i32, i32) {
    %c0_i32 = arith.constant 0 : i32
    %c0_i32_0 = arith.constant 0 : i32
    return %arg0, %c0_i32 : i32, i32
  }
  func.func @transform_1(%arg0: i32, %arg1: i32) -> (i32, i32) {
    %c0_i32 = arith.constant 0 : i32
    %c0_i32_0 = arith.constant 0 : i32
    return %c0_i32, %arg1 : i32, i32
  }
  func.func @transform_2(%arg0: i32, %arg1: i32) -> (i32, i32) {
    %c0_i32 = arith.constant 0 : i32
    %c0_i32_0 = arith.constant 0 : i32
    return %c0_i32, %arg1 : i32, i32
  }
  func.func @transform_3(%arg0: i32, %arg1: i32) -> (i32, i32) {
    %c0_i32 = arith.constant 0 : i32
    return %arg0, %arg1 : i32, i32
  }
}

</mosaic_0001>

<llo_original>
// kernel: tpu_custom_call.1
$region0: #{tpu_custom_call.1}
  #allocation0 [shape = 'u32[]', space=smem, size = 0x4, offset = 0x4, fixed_abs, tag = 'smem constant byte address 0x4 - core index']
  #allocation1 [shape = 'u32[144,128]{1,0:T(1,128)}', space=vmem, size = 0x12000, scoped, tag = 'internal scratch']
  %s0 = inlined_call_operand.hbm [shape: f32[8,16], index: 0, kind: input, shape index: {}]
  %s1 = inlined_call_operand.hbm [shape: f32[16,1024], index: 1, kind: input, shape index: {}]
  %s2 = inlined_call_operand.hbm [shape: f32[1,1024], index: 2, kind: input, shape index: {}]
  %s3 = inlined_call_operand.hbm [shape: bf16[8,1024], index: 3, kind: output, shape index: {}]
  %s4 = sld [smem:[#allocation0]]
  $region34: #{tpu_custom_call.1} parent=0
    _
  %s6 = ssub.s32 1, %s4
  %s7 = scalar_select 0, %s6, %s4
  $region1: #{tpu_custom_call.1} parent=0
    #allocation2 [shape = 'u8[4096]{0}', space=vmem, size = 0x1000, scoped, tag = 'input window, operand 0, single buffered']
    #allocation3 [shape = 's32[1]{0}', space=sflag, size = 0x4, scoped, tag = 'scoped memory for tpu_custom_call.1']
    #allocation4 [shape = 's32[1]{0}', space=sflag, size = 0x4, scoped, tag = 'scoped memory for tpu_custom_call.1']
    #allocation5 [shape = 'u8[65536]{0}', space=vmem, size = 0x10000, scoped, tag = 'input window, operand 1, single buffered']
    #allocation6 [shape = 's32[1]{0}', space=sflag, size = 0x4, scoped, tag = 'scoped memory for tpu_custom_call.1']
    #allocation7 [shape = 'u8[4096]{0}', space=vmem, size = 0x1000, scoped, tag = 'input window, operand 2, single buffered']
    #allocation8 [shape = 'u8[16384]{0}', space=vmem, size = 0x4000, scoped, tag = 'output window, operand 0, single buffered']
    %8 = vsyncpa [#allocation3], 0
    %9 = vsyncpa [#allocation6], 0
    %10 = vsyncpa [#allocation4], 0
    // Predicated region
    $region2: #{tpu_custom_call.1} parent=1 // pred_check
      _
    $region3: #{tpu_custom_call.1} parent=1 // pred_check_branch
      %12 = sbr.rel (0) target = $region5
    $region4: #{tpu_custom_call.1} parent=1 // pred_region
      %s14 = ssub.s32 128, 128
      %15 = vsyncadd [#allocation3], %s14
      %s17 = sshll.u32 [#allocation2], 4
      %s18 = int_to_ptr.vmem [resolvable:$true] %s17
      %20 = dma.hbm_to_vmem [thread:$0]  %s0, 128, %s18, [#allocation3]
    $region5: #{tpu_custom_call.1} parent=1 // pred_fallthru
      _
    // Predicated region
    $region6: #{tpu_custom_call.1} parent=1 // pred_check
      _
    $region7: #{tpu_custom_call.1} parent=1 // pred_check_branch
      %22 = sbr.rel (0) target = $region9
    $region8: #{tpu_custom_call.1} parent=1 // pred_region
      %s24 = ssub.s32 2048, 2048
      %25 = vsyncadd [#allocation6], %s24
      %s26 = sshll.u32 [#allocation5], 4
      %s27 = int_to_ptr.vmem [resolvable:$true] %s26
      %32 = dma.hbm_to_vmem [thread:$0]  %s1, 2048, %s27, [#allocation6], 1024, 1024, 64
    $region9: #{tpu_custom_call.1} parent=1 // pred_fallthru
      _
    // Predicated region
    $region10: #{tpu_custom_call.1} parent=1 // pred_check
      _
    $region11: #{tpu_custom_call.1} parent=1 // pred_check_branch
      %34 = sbr.rel (0) target = $region13
    $region12: #{tpu_custom_call.1} parent=1 // pred_region
      %s36 = ssub.s32 128, 128
      %37 = vsyncadd [#allocation6], %s36
      %s39 = sshll.u32 [#allocation7], 4
      %s40 = int_to_ptr.vmem [resolvable:$true] %s39
      %42 = dma.hbm_to_vmem [thread:$0]  %s2, 128, %s40, [#allocation6]
    $region13: #{tpu_custom_call.1} parent=1 // pred_fallthru
      _
    // Predicated region
    $region14: #{tpu_custom_call.1} parent=1 // pred_check
      _
    $region15: #{tpu_custom_call.1} parent=1 // pred_check_branch
      %44 = sbr.rel (0) target = $region17
    $region16: #{tpu_custom_call.1} parent=1 // pred_region
      %45 = dma.done [#allocation3], 128
    $region17: #{tpu_custom_call.1} parent=1 // pred_fallthru
      _
    // Predicated region
    $region18: #{tpu_custom_call.1} parent=1 // pred_check
      _
    $region19: #{tpu_custom_call.1} parent=1 // pred_check_branch
      %47 = sbr.rel (0) target = $region21
    $region20: #{tpu_custom_call.1} parent=1 // pred_region
      %48 = dma.done [#allocation6], 2048
    $region21: #{tpu_custom_call.1} parent=1 // pred_fallthru
      _
    // Predicated region
    $region22: #{tpu_custom_call.1} parent=1 // pred_check
      _
    $region23: #{tpu_custom_call.1} parent=1 // pred_check_branch
      %50 = sbr.rel (0) target = $region25
    $region24: #{tpu_custom_call.1} parent=1 // pred_region
      %51 = dma.done [#allocation6], 128
    $region25: #{tpu_custom_call.1} parent=1 // pred_fallthru
      _
    %v52 = vld [vmem:[#allocation2] sm:$0xff]
    %v53 = vld [vmem:[#allocation5] sm:$0xff]
    %v54 = vld [vmem:[#allocation5 + $0x8] sm:$0xff]
    %v55 = vld [vmem:[#allocation5 + $0x10] sm:$0xff]
    %v56 = vld [vmem:[#allocation5 + $0x18] sm:$0xff]
    %v57 = vld [vmem:[#allocation5 + $0x20] sm:$0xff]
    %v58 = vld [vmem:[#allocation5 + $0x28] sm:$0xff]
    %v59 = vld [vmem:[#allocation5 + $0x30] sm:$0xff]
    %v60 = vld [vmem:[#allocation5 + $0x38] sm:$0xff]
    %v61 = vld [vmem:[#allocation5 + $0x40] sm:$0xff]
    %v62 = vld [vmem:[#allocation5 + $0x48] sm:$0xff]
    %v63 = vld [vmem:[#allocation5 + $0x50] sm:$0xff]
    %v64 = vld [vmem:[#allocation5 + $0x58] sm:$0xff]
    %v65 = vld [vmem:[#allocation5 + $0x60] sm:$0xff]
    %v66 = vld [vmem:[#allocation5 + $0x68] sm:$0xff]
    %v67 = vld [vmem:[#allocation5 + $0x70] sm:$0xff]
    %v68 = vld [vmem:[#allocation5 + $0x78] sm:$0xff]
    %v69 = vld [vmem:[#allocation7] sm:$0xff]
    %v71 = vlaneseq
    %v72 = vshrl.u32 %v71, 7
    %v73 = vsub.s32 0, %v72
    %v74 = vrot.slane %v69, %v73
    %v75 = vlaneseq
    %v76 = vshrl.u32 %v75, 7
    %v77 = vsub.s32 1, %v76
    %v78 = vrot.slane %v69, %v77
    %v79 = vlaneseq
    %v80 = vshrl.u32 %v79, 7
    %v81 = vsub.s32 2, %v80
    %v82 = vrot.slane %v69, %v81
    %v83 = vlaneseq
    %v84 = vshrl.u32 %v83, 7
    %v85 = vsub.s32 3, %v84
    %v86 = vrot.slane %v69, %v85
    %v87 = vlaneseq
    %v88 = vshrl.u32 %v87, 7
    %v89 = vsub.s32 4, %v88
    %v90 = vrot.slane %v69, %v89
    %v91 = vlaneseq
    %v92 = vshrl.u32 %v91, 7
    %v93 = vsub.s32 5, %v92
    %v94 = vrot.slane %v69, %v93
    %v95 = vlaneseq
    %v96 = vshrl.u32 %v95, 7
    %v97 = vsub.s32 6, %v96
    %v98 = vrot.slane %v69, %v97
    %v99 = vlaneseq
    %v100 = vshrl.u32 %v99, 7
    %v101 = vsub.s32 7, %v100
    %v102 = vrot.slane %v69, %v101
    %vm111 = vcmask 130048
    %v113 = vsel %vm111, %v52, 0
    %115 = vmatprep.subr.mxu0 %v54
    %116 = vmatpush1.msra.mxu0 %v53
    %117 = vmatprep.subr.mxu0 %v62
    %118 = vmatpush1.msra.mxu0 %v61
    %119 = vmatprep.subr.mxu0 0.0
    %120 = vmatpush1.msra.mxu0 0.0
    %121 = vmatprep.subr.mxu0 0.0
    %122 = vmatpush1.msra.mxu0 0.0
    %123 = vmatprep.subr.mxu0 0.0
    %124 = vmatpush1.msra.mxu0 0.0
    %125 = vmatprep.subr.mxu0 0.0
    %126 = vmatpush1.msra.mxu0 0.0
    %127 = vmatprep.subr.mxu0 0.0
    %128 = vmatpush1.msra.mxu0 0.0
    %129 = vmatprep.subr.mxu0 0.0
    %130 = vmatpush1.msra.mxu0 0.0
    %131 = vmatprep.subr.mxu0 0.0
    %132 = vmatpush1.msra.mxu0 0.0
    %133 = vmatprep.subr.mxu0 0.0
    %134 = vmatpush1.msra.mxu0 0.0
    %135 = vmatprep.subr.mxu0 0.0
    %136 = vmatpush1.msra.mxu0 0.0
    %137 = vmatprep.subr.mxu0 0.0
    %138 = vmatpush1.msra.mxu0 0.0
    %139 = vmatprep.subr.mxu0 0.0
    %140 = vmatpush1.msra.mxu0 0.0
    %141 = vmatprep.subr.mxu0 0.0
    %142 = vmatpush1.msra.mxu0 0.0
    %143 = vmatprep.subr.mxu0 0.0
    %144 = vmatpush1.msra.mxu0 0.0
    %145 = vmatprep.subr.mxu0 0.0
    %146 = vmatpush1.msra.mxu0 0.0
    %147 = vmatprep.subr.mxu0 0.0
    %148 = vmatpush1.msra.mxu0 0.0
    %149 = vmatprep.subr.mxu0 0.0
    %150 = vmatpush1.msra.mxu0 0.0
    %151 = vmatprep.subr.mxu0 0.0
    %152 = vmatpush1.msra.mxu0 0.0
    %153 = vmatprep.subr.mxu0 0.0
    %154 = vmatpush1.msra.mxu0 0.0
    %155 = vmatprep.subr.mxu0 0.0
    %156 = vmatpush1.msra.mxu0 0.0
    %157 = vmatprep.subr.mxu0 0.0
    %158 = vmatpush1.msra.mxu0 0.0
    %159 = vmatprep.subr.mxu0 0.0
    %160 = vmatpush1.msra.mxu0 0.0
    %161 = vmatprep.subr.mxu0 0.0
    %162 = vmatpush1.msra.mxu0 0.0
    %163 = vmatprep.subr.mxu0 0.0
    %164 = vmatpush1.msra.mxu0 0.0
    %165 = vmatprep.subr.mxu0 0.0
    %166 = vmatpush1.msra.mxu0 0.0
    %167 = vmatprep.subr.mxu0 0.0
    %168 = vmatpush1.msra.mxu0 0.0
    %169 = vmatprep.subr.mxu0 0.0
    %170 = vmatpush1.msra.mxu0 0.0
    %171 = vmatprep.subr.mxu0 0.0
    %172 = vmatpush1.msra.mxu0 0.0
    %173 = vmatprep.subr.mxu0 0.0
    %174 = vmatpush1.msra.mxu0 0.0
    %175 = vmatprep.subr.mxu0 0.0
    %176 = vmatpush1.msra.mxu0 0.0
    %177 = vmatprep.subr.mxu0 0.0
    %178 = vmatpush1.msra.mxu0 0.0
    %179 = vmatprep.mubr.f32.mxu0 0.0
    %180 = vmatmul.mubr.f32.gmra.mrb[0].mxu0 %v113
    %v181 = vpop.f32.mrb[0].mxu0
    %v182 = vadd.f32 %v74, %v181
    %v183 = vpop.f32.mrb[0].mxu0
    %v184 = vadd.f32 %v78, %v183
    %185 = vdwg.mxu0
    %186 = vmatprep.subr.mxu0 %v56
    %187 = vmatpush1.msra.mxu0 %v55
    %188 = vmatprep.subr.mxu0 %v64
    %189 = vmatpush1.msra.mxu0 %v63
    %190 = vmatprep.subr.mxu0 0.0
    %191 = vmatpush1.msra.mxu0 0.0
    %192 = vmatprep.subr.mxu0 0.0
    %193 = vmatpush1.msra.mxu0 0.0
    %194 = vmatprep.subr.mxu0 0.0
    %195 = vmatpush1.msra.mxu0 0.0
    %196 = vmatprep.subr.mxu0 0.0
    %197 = vmatpush1.msra.mxu0 0.0
    %198 = vmatprep.subr.mxu0 0.0
    %199 = vmatpush1.msra.mxu0 0.0
    %200 = vmatprep.subr.mxu0 0.0
    %201 = vmatpush1.msra.mxu0 0.0
    %202 = vmatprep.subr.mxu0 0.0
    %203 = vmatpush1.msra.mxu0 0.0
    %204 = vmatprep.subr.mxu0 0.0
    %205 = vmatpush1.msra.mxu0 0.0
    %206 = vmatprep.subr.mxu0 0.0
    %207 = vmatpush1.msra.mxu0 0.0
    %208 = vmatprep.subr.mxu0 0.0
    %209 = vmatpush1.msra.mxu0 0.0
    %210 = vmatprep.subr.mxu0 0.0
    %211 = vmatpush1.msra.mxu0 0.0
    %212 = vmatprep.subr.mxu0 0.0
    %213 = vmatpush1.msra.mxu0 0.0
    %214 = vmatprep.subr.mxu0 0.0
    %215 = vmatpush1.msra.mxu0 0.0
    %216 = vmatprep.subr.mxu0 0.0
    %217 = vmatpush1.msra.mxu0 0.0
    %218 = vmatprep.subr.mxu0 0.0
    %219 = vmatpush1.msra.mxu0 0.0
    %220 = vmatprep.subr.mxu0 0.0
    %221 = vmatpush1.msra.mxu0 0.0
    %222 = vmatprep.subr.mxu0 0.0
    %223 = vmatpush1.msra.mxu0 0.0
    %224 = vmatprep.subr.mxu0 0.0
    %225 = vmatpush1.msra.mxu0 0.0
    %226 = vmatprep.subr.mxu0 0.0
    %227 = vmatpush1.msra.mxu0 0.0
    %228 = vmatprep.subr.mxu0 0.0
    %229 = vmatpush1.msra.mxu0 0.0
    %230 = vmatprep.subr.mxu0 0.0
    %231 = vmatpush1.msra.mxu0 0.0
    %232 = vmatprep.subr.mxu0 0.0
    %233 = vmatpush1.msra.mxu0 0.0
    %234 = vmatprep.subr.mxu0 0.0
    %235 = vmatpush1.msra.mxu0 0.0
    %236 = vmatprep.subr.mxu0 0.0
    %237 = vmatpush1.msra.mxu0 0.0
    %238 = vmatprep.subr.mxu0 0.0
    %239 = vmatpush1.msra.mxu0 0.0
    %240 = vmatprep.subr.mxu0 0.0
    %241 = vmatpush1.msra.mxu0 0.0
    %242 = vmatprep.subr.mxu0 0.0
    %243 = vmatpush1.msra.mxu0 0.0
    %244 = vmatprep.subr.mxu0 0.0
    %245 = vmatpush1.msra.mxu0 0.0
    %246 = vmatprep.subr.mxu0 0.0
    %247 = vmatpush1.msra.mxu0 0.0
    %248 = vmatprep.subr.mxu0 0.0
    %249 = vmatpush1.msra.mxu0 0.0
    %250 = vmatprep.mubr.f32.mxu0 0.0
    %251 = vmatmul.mubr.f32.gmra.mrb[0].mxu0 %v113
    %v252 = vpop.f32.mrb[0].mxu0
    %v253 = vadd.f32 %v82, %v252
    %v254 = vpop.f32.mrb[0].mxu0
    %v255 = vadd.f32 %v86, %v254
    %256 = vdwg.mxu0
    %257 = vmatprep.subr.mxu0 %v58
    %258 = vmatpush1.msra.mxu0 %v57
    %259 = vmatprep.subr.mxu0 %v66
    %260 = vmatpush1.msra.mxu0 %v65
    %261 = vmatprep.subr.mxu0 0.0
    %262 = vmatpush1.msra.mxu0 0.0
    %263 = vmatprep.subr.mxu0 0.0
    %264 = vmatpush1.msra.mxu0 0.0
    %265 = vmatprep.subr.mxu0 0.0
    %266 = vmatpush1.msra.mxu0 0.0
    %267 = vmatprep.subr.mxu0 0.0
    %268 = vmatpush1.msra.mxu0 0.0
    %269 = vmatprep.subr.mxu0 0.0
    %270 = vmatpush1.msra.mxu0 0.0
    %271 = vmatprep.subr.mxu0 0.0
    %272 = vmatpush1.msra.mxu0 0.0
    %273 = vmatprep.subr.mxu0 0.0
    %274 = vmatpush1.msra.mxu0 0.0
    %275 = vmatprep.subr.mxu0 0.0
    %276 = vmatpush1.msra.mxu0 0.0
    %277 = vmatprep.subr.mxu0 0.0
    %278 = vmatpush1.msra.mxu0 0.0
    %279 = vmatprep.subr.mxu0 0.0
    %280 = vmatpush1.msra.mxu0 0.0
    %281 = vmatprep.subr.mxu0 0.0
    %282 = vmatpush1.msra.mxu0 0.0
    %283 = vmatprep.subr.mxu0 0.0
    %284 = vmatpush1.msra.mxu0 0.0
    %285 = vmatprep.subr.mxu0 0.0
    %286 = vmatpush1.msra.mxu0 0.0
    %287 = vmatprep.subr.mxu0 0.0
    %288 = vmatpush1.msra.mxu0 0.0
    %289 = vmatprep.subr.mxu0 0.0
    %290 = vmatpush1.msra.mxu0 0.0
    %291 = vmatprep.subr.mxu0 0.0
    %292 = vmatpush1.msra.mxu0 0.0
    %293 = vmatprep.subr.mxu0 0.0
    %294 = vmatpush1.msra.mxu0 0.0
    %295 = vmatprep.subr.mxu0 0.0
    %296 = vmatpush1.msra.mxu0 0.0
    %297 = vmatprep.subr.mxu0 0.0
    %298 = vmatpush1.msra.mxu0 0.0
    %299 = vmatprep.subr.mxu0 0.0
    %300 = vmatpush1.msra.mxu0 0.0
    %301 = vmatprep.subr.mxu0 0.0
    %302 = vmatpush1.msra.mxu0 0.0
    %303 = vmatprep.subr.mxu0 0.0
    %304 = vmatpush1.msra.mxu0 0.0
    %305 = vmatprep.subr.mxu0 0.0
    %306 = vmatpush1.msra.mxu0 0.0
    %307 = vmatprep.subr.mxu0 0.0
    %308 = vmatpush1.msra.mxu0 0.0
    %309 = vmatprep.subr.mxu0 0.0
    %310 = vmatpush1.msra.mxu0 0.0
    %311 = vmatprep.subr.mxu0 0.0
    %312 = vmatpush1.msra.mxu0 0.0
    %313 = vmatprep.subr.mxu0 0.0
    %314 = vmatpush1.msra.mxu0 0.0
    %315 = vmatprep.subr.mxu0 0.0
    %316 = vmatpush1.msra.mxu0 0.0
    %317 = vmatprep.subr.mxu0 0.0
    %318 = vmatpush1.msra.mxu0 0.0
    %319 = vmatprep.subr.mxu0 0.0
    %320 = vmatpush1.msra.mxu0 0.0
    %321 = vmatprep.mubr.f32.mxu0 0.0
    %322 = vmatmul.mubr.f32.gmra.mrb[0].mxu0 %v113
    %v323 = vpop.f32.mrb[0].mxu0
    %v324 = vadd.f32 %v90, %v323
    %v325 = vpop.f32.mrb[0].mxu0
    %v326 = vadd.f32 %v94, %v325
    %327 = vdwg.mxu0
    %328 = vmatprep.subr.mxu0 %v60
    %329 = vmatpush1.msra.mxu0 %v59
    %330 = vmatprep.subr.mxu0 %v68
    %331 = vmatpush1.msra.mxu0 %v67
    %332 = vmatprep.subr.mxu0 0.0
    %333 = vmatpush1.msra.mxu0 0.0
    %334 = vmatprep.subr.mxu0 0.0
    %335 = vmatpush1.msra.mxu0 0.0
    %336 = vmatprep.subr.mxu0 0.0
    %337 = vmatpush1.msra.mxu0 0.0
    %338 = vmatprep.subr.mxu0 0.0
    %339 = vmatpush1.msra.mxu0 0.0
    %340 = vmatprep.subr.mxu0 0.0
    %341 = vmatpush1.msra.mxu0 0.0
    %342 = vmatprep.subr.mxu0 0.0
    %343 = vmatpush1.msra.mxu0 0.0
    %344 = vmatprep.subr.mxu0 0.0
    %345 = vmatpush1.msra.mxu0 0.0
    %346 = vmatprep.subr.mxu0 0.0
    %347 = vmatpush1.msra.mxu0 0.0
    %348 = vmatprep.subr.mxu0 0.0
    %349 = vmatpush1.msra.mxu0 0.0
    %350 = vmatprep.subr.mxu0 0.0
    %351 = vmatpush1.msra.mxu0 0.0
    %352 = vmatprep.subr.mxu0 0.0
    %353 = vmatpush1.msra.mxu0 0.0
    %354 = vmatprep.subr.mxu0 0.0
    %355 = vmatpush1.msra.mxu0 0.0
    %356 = vmatprep.subr.mxu0 0.0
    %357 = vmatpush1.msra.mxu0 0.0
    %358 = vmatprep.subr.mxu0 0.0
    %359 = vmatpush1.msra.mxu0 0.0
    %360 = vmatprep.subr.mxu0 0.0
    %361 = vmatpush1.msra.mxu0 0.0
    %362 = vmatprep.subr.mxu0 0.0
    %363 = vmatpush1.msra.mxu0 0.0
    %364 = vmatprep.subr.mxu0 0.0
    %365 = vmatpush1.msra.mxu0 0.0
    %366 = vmatprep.subr.mxu0 0.0
    %367 = vmatpush1.msra.mxu0 0.0
    %368 = vmatprep.subr.mxu0 0.0
    %369 = vmatpush1.msra.mxu0 0.0
    %370 = vmatprep.subr.mxu0 0.0
    %371 = vmatpush1.msra.mxu0 0.0
    %372 = vmatprep.subr.mxu0 0.0
    %373 = vmatpush1.msra.mxu0 0.0
    %374 = vmatprep.subr.mxu0 0.0
    %375 = vmatpush1.msra.mxu0 0.0
    %376 = vmatprep.subr.mxu0 0.0
    %377 = vmatpush1.msra.mxu0 0.0
    %378 = vmatprep.subr.mxu0 0.0
    %379 = vmatpush1.msra.mxu0 0.0
    %380 = vmatprep.subr.mxu0 0.0
    %381 = vmatpush1.msra.mxu0 0.0
    %382 = vmatprep.subr.mxu0 0.0
    %383 = vmatpush1.msra.mxu0 0.0
    %384 = vmatprep.subr.mxu0 0.0
    %385 = vmatpush1.msra.mxu0 0.0
    %386 = vmatprep.subr.mxu0 0.0
    %387 = vmatpush1.msra.mxu0 0.0
    %388 = vmatprep.subr.mxu0 0.0
    %389 = vmatpush1.msra.mxu0 0.0
    %390 = vmatprep.subr.mxu0 0.0
    %391 = vmatpush1.msra.mxu0 0.0
    %392 = vmatprep.mubr.f32.mxu0 0.0
    %393 = vmatmul.mubr.f32.gmra.mrb[0].mxu0 %v113
    %v394 = vpop.f32.mrb[0].mxu0
    %v395 = vadd.f32 %v98, %v394
    %v396 = vpop.f32.mrb[0].mxu0
    %v397 = vadd.f32 %v102, %v396
    %398 = vdwg.mxu0
    %v399 = vtanh.pop %v182
    %v400 = vtanh.pop %v184
    %v401 = vtanh.pop %v253
    %v402 = vtanh.pop %v255
    %v403 = vtanh.pop %v324
    %v404 = vtanh.pop %v326
    %v405 = vtanh.pop %v395
    %v406 = vtanh.pop %v397
    %v407 = vpack.c.bf16 %v399, %v399
    %v408 = vpack.c.bf16 %v400, %v400
    %v409 = vpack.c.bf16 %v401, %v401
    %v410 = vpack.c.bf16 %v402, %v402
    %v411 = vpack.c.bf16 %v403, %v403
    %v412 = vpack.c.bf16 %v404, %v404
    %v413 = vpack.c.bf16 %v405, %v405
    %v414 = vpack.c.bf16 %v406, %v406
    %v423 = vunpack.c.l.b16 %v407
    %v424 = vunpack.c.l.b16 %v408
    %v425 = vunpack.c.l.b16 %v409
    %v426 = vunpack.c.l.b16 %v410
    %v427 = vunpack.c.l.b16 %v411
    %v428 = vunpack.c.l.b16 %v412
    %v429 = vunpack.c.l.b16 %v413
    %v430 = vunpack.c.l.b16 %v414
    %v431 = vpack.c.b16 %v424, %v423
    %v432 = vpack.c.b16 %v426, %v425
    %v433 = vpack.c.b16 %v428, %v427
    %v434 = vpack.c.b16 %v430, %v429
    %439 = vst [vmem:[#allocation8] sm:$0xff] %v431
    %440 = vst [vmem:[#allocation8 + $0x8] sm:$0xff] %v432
    %441 = vst [vmem:[#allocation8 + $0x10] sm:$0xff] %v433
    %442 = vst [vmem:[#allocation8 + $0x18] sm:$0xff] %v434
    // Predicated region
    $region26: #{tpu_custom_call.1} parent=1 // pred_check
      _
    $region27: #{tpu_custom_call.1} parent=1 // pred_check_branch
      %444 = sbr.rel (0) target = $region29
    $region28: #{tpu_custom_call.1} parent=1 // pred_region
      %s446 = ssub.s32 512, 512
      %447 = vsyncadd [#allocation4], %s446
      %s449 = sshll.u32 [#allocation8], 4
      %s450 = int_to_ptr.vmem [resolvable:$true] %s449
      %452 = dma.vmem_to_hbm [thread:$0]  %s450, 512, %s3, [#allocation4]
    $region29: #{tpu_custom_call.1} parent=1 // pred_fallthru
      _
    // Predicated region
    $region30: #{tpu_custom_call.1} parent=1 // pred_check
      _
    $region31: #{tpu_custom_call.1} parent=1 // pred_check_branch
      %454 = sbr.rel (0) target = $region33
    $region32: #{tpu_custom_call.1} parent=1 // pred_region
      %455 = dma.done [#allocation4], 512
    $region33: #{tpu_custom_call.1} parent=1 // pred_fallthru
      _
    %456 = vsyncpa [#allocation3], 1
    %457 = vsyncpa [#allocation6], 1
    %458 = vsyncpa [#allocation4], 1

// kernel: tpu_custom_call.1
$region0: #{tpu_custom_call.1}
  #allocation0 [shape = 'u32[]', space=smem, size = 0x4, offset = 0x4, fixed_abs, tag = 'smem constant byte address 0x4 - core index']
  #allocation1 [shape = 'u32[144,128]{1,0:T(1,128)}', space=vmem, size = 0x12000, scoped, tag = 'internal scratch']
  %s0 = inlined_call_operand.hbm [shape: f32[8,16], index: 0, kind: input, shape index: {}]
  %s1 = inlined_call_operand.hbm [shape: f32[16,1024], index: 1, kind: input, shape index: {}]
  %s2 = inlined_call_operand.hbm [shape: f32[1,1024], index: 2, kind: input, shape index: {}]
  %s3 = inlined_call_operand.hbm [shape: bf16[8,1024], index: 3, kind: output, shape index: {}]
  %s4 = sld [smem:[#allocation0]]
  $region34: #{tpu_custom_call.1} parent=0
    _
  %s6 = ssub.s32 1, %s4
  %s7 = scalar_select 0, %s6, %s4
  $region1: #{tpu_custom_call.1} parent=0
    #allocation2 [shape = 'u8[4096]{0}', space=vmem, size = 0x1000, scoped, tag = 'input window, operand 0, single buffered']
    #allocation3 [shape = 's32[1]{0}', space=sflag, size = 0x4, scoped, tag = 'scoped memory for tpu_custom_call.1']
    #allocation4 [shape = 's32[1]{0}', space=sflag, size = 0x4, scoped, tag = 'scoped memory for tpu_custom_call.1']
    #allocation5 [shape = 'u8[65536]{0}', space=vmem, size = 0x10000, scoped, tag = 'input window, operand 1, single buffered']
    #allocation6 [shape = 's32[1]{0}', space=sflag, size = 0x4, scoped, tag = 'scoped memory for tpu_custom_call.1']
    #allocation7 [shape = 'u8[4096]{0}', space=vmem, size = 0x1000, scoped, tag = 'input window, operand 2, single buffered']
    #allocation8 [shape = 'u8[16384]{0}', space=vmem, size = 0x4000, scoped, tag = 'output window, operand 0, single buffered']
    %8 = vsyncpa [#allocation3], 0
    %9 = vsyncpa [#allocation6], 0
    %10 = vsyncpa [#allocation4], 0
    // Predicated region
    $region2: #{tpu_custom_call.1} parent=1 // pred_check
      _
    $region3: #{tpu_custom_call.1} parent=1 // pred_check_branch
      %12 = sbr.rel (0) target = $region5
    $region4: #{tpu_custom_call.1} parent=1 // pred_region
      %s14 = ssub.s32 128, 128
      %15 = vsyncadd [#allocation3], %s14
      %s17 = sshll.u32 [#allocation2], 4
      %s18 = int_to_ptr.vmem [resolvable:$true] %s17
      %20 = dma.hbm_to_vmem [thread:$0]  %s0, 128, %s18, [#allocation3]
    $region5: #{tpu_custom_call.1} parent=1 // pred_fallthru
      _
    // Predicated region
    $region6: #{tpu_custom_call.1} parent=1 // pred_check
      _
    $region7: #{tpu_custom_call.1} parent=1 // pred_check_branch
      %22 = sbr.rel (0) target = $region9
    $region8: #{tpu_custom_call.1} parent=1 // pred_region
      %s24 = ssub.s32 2048, 2048
      %25 = vsyncadd [#allocation6], %s24
      %s26 = sshll.u32 [#allocation5], 4
      %s27 = int_to_ptr.vmem [resolvable:$true] %s26
      %32 = dma.hbm_to_vmem [thread:$0]  %s1, 2048, %s27, [#allocation6], 1024, 1024, 64
    $region9: #{tpu_custom_call.1} parent=1 // pred_fallthru
      _
    // Predicated region
    $region10: #{tpu_custom_call.1} parent=1 // pred_check
      _
    $region11: #{tpu_custom_call.1} parent=1 // pred_check_branch
      %34 = sbr.rel (0) target = $region13
    $region12: #{tpu_custom_call.1} parent=1 // pred_region
      %s36 = ssub.s32 128, 128
      %37 = vsyncadd [#allocation6], %s36
      %s39 = sshll.u32 [#allocation7], 4
      %s40 = int_to_ptr.vmem [resolvable:$true] %s39
      %42 = dma.hbm_to_vmem [thread:$0]  %s2, 128, %s40, [#allocation6]
    $region13: #{tpu_custom_call.1} parent=1 // pred_fallthru
      _
    // Predicated region
    $region14: #{tpu_custom_call.1} parent=1 // pred_check
      _
    $region15: #{tpu_custom_call.1} parent=1 // pred_check_branch
      %44 = sbr.rel (0) target = $region17
    $region16: #{tpu_custom_call.1} parent=1 // pred_region
      %45 = dma.done [#allocation3], 128
    $region17: #{tpu_custom_call.1} parent=1 // pred_fallthru
      _
    // Predicated region
    $region18: #{tpu_custom_call.1} parent=1 // pred_check
      _
    $region19: #{tpu_custom_call.1} parent=1 // pred_check_branch
      %47 = sbr.rel (0) target = $region21
    $region20: #{tpu_custom_call.1} parent=1 // pred_region
      %48 = dma.done [#allocation6], 2048
    $region21: #{tpu_custom_call.1} parent=1 // pred_fallthru
      _
    // Predicated region
    $region22: #{tpu_custom_call.1} parent=1 // pred_check
      _
    $region23: #{tpu_custom_call.1} parent=1 // pred_check_branch
      %50 = sbr.rel (0) target = $region25
    $region24: #{tpu_custom_call.1} parent=1 // pred_region
      %51 = dma.done [#allocation6], 128
    $region25: #{tpu_custom_call.1} parent=1 // pred_fallthru
      _
    %v52 = vld [vmem:[#allocation2] sm:$0xff]
    %v53 = vld [vmem:[#allocation5] sm:$0xff]
    %v54 = vld [vmem:[#allocation5 + $0x8] sm:$0xff]
    %v55 = vld [vmem:[#allocation5 + $0x10] sm:$0xff]
    %v56 = vld [vmem:[#allocation5 + $0x18] sm:$0xff]
    %v57 = vld [vmem:[#allocation5 + $0x20] sm:$0xff]
    %v58 = vld [vmem:[#allocation5 + $0x28] sm:$0xff]
    %v59 = vld [vmem:[#allocation5 + $0x30] sm:$0xff]
    %v60 = vld [vmem:[#allocation5 + $0x38] sm:$0xff]
    %v61 = vld [vmem:[#allocation5 + $0x40] sm:$0xff]
    %v62 = vld [vmem:[#allocation5 + $0x48] sm:$0xff]
    %v63 = vld [vmem:[#allocation5 + $0x50] sm:$0xff]
    %v64 = vld [vmem:[#allocation5 + $0x58] sm:$0xff]
    %v65 = vld [vmem:[#allocation5 + $0x60] sm:$0xff]
    %v66 = vld [vmem:[#allocation5 + $0x68] sm:$0xff]
    %v67 = vld [vmem:[#allocation5 + $0x70] sm:$0xff]
    %v68 = vld [vmem:[#allocation5 + $0x78] sm:$0xff]
    %v69 = vld [vmem:[#allocation7] sm:$0xff]
    %v71 = vlaneseq
    %v72 = vshrl.u32 %v71, 7
    %v73 = vsub.s32 0, %v72
    %v74 = vrot.slane %v69, %v73
    %v75 = vlaneseq
    %v76 = vshrl.u32 %v75, 7
    %v77 = vsub.s32 1, %v76
    %v78 = vrot.slane %v69, %v77
    %v79 = vlaneseq
    %v80 = vshrl.u32 %v79, 7
    %v81 = vsub.s32 2, %v80
    %v82 = vrot.slane %v69, %v81
    %v83 = vlaneseq
    %v84 = vshrl.u32 %v83, 7
    %v85 = vsub.s32 3, %v84
    %v86 = vrot.slane %v69, %v85
    %v87 = vlaneseq
    %v88 = vshrl.u32 %v87, 7
    %v89 = vsub.s32 4, %v88
    %v90 = vrot.slane %v69, %v89
    %v91 = vlaneseq
    %v92 = vshrl.u32 %v91, 7
    %v93 = vsub.s32 5, %v92
    %v94 = vrot.slane %v69, %v93
    %v95 = vlaneseq
    %v96 = vshrl.u32 %v95, 7
    %v97 = vsub.s32 6, %v96
    %v98 = vrot.slane %v69, %v97
    %v99 = vlaneseq
    %v100 = vshrl.u32 %v99, 7
    %v101 = vsub.s32 7, %v100
    %v102 = vrot.slane %v69, %v101
    %vm111 = vcmask 130048
    %v113 = vsel %vm111, %v52, 0
    %115 = vmatprep.subr.mxu0 %v54
    %116 = vmatpush1.msra.mxu0 %v53
    %117 = vmatprep.subr.mxu0 %v62
    %118 = vmatpush1.msra.mxu0 %v61
    %119 = vmatprep.subr.mxu0 0.0
    %120 = vmatpush1.msra.mxu0 0.0
    %121 = vmatprep.subr.mxu0 0.0
    %122 = vmatpush1.msra.mxu0 0.0
    %123 = vmatprep.subr.mxu0 0.0
    %124 = vmatpush1.msra.mxu0 0.0
    %125 = vmatprep.subr.mxu0 0.0
    %126 = vmatpush1.msra.mxu0 0.0
    %127 = vmatprep.subr.mxu0 0.0
    %128 = vmatpush1.msra.mxu0 0.0
    %129 = vmatprep.subr.mxu0 0.0
    %130 = vmatpush1.msra.mxu0 0.0
    %131 = vmatprep.subr.mxu0 0.0
    %132 = vmatpush1.msra.mxu0 0.0
    %133 = vmatprep.subr.mxu0 0.0
    %134 = vmatpush1.msra.mxu0 0.0
    %135 = vmatprep.subr.mxu0 0.0
    %136 = vmatpush1.msra.mxu0 0.0
    %137 = vmatprep.subr.mxu0 0.0
    %138 = vmatpush1.msra.mxu0 0.0
    %139 = vmatprep.subr.mxu0 0.0
    %140 = vmatpush1.msra.mxu0 0.0
    %141 = vmatprep.subr.mxu0 0.0
    %142 = vmatpush1.msra.mxu0 0.0
    %143 = vmatprep.subr.mxu0 0.0
    %144 = vmatpush1.msra.mxu0 0.0
    %145 = vmatprep.subr.mxu0 0.0
    %146 = vmatpush1.msra.mxu0 0.0
    %147 = vmatprep.subr.mxu0 0.0
    %148 = vmatpush1.msra.mxu0 0.0
    %149 = vmatprep.subr.mxu0 0.0
    %150 = vmatpush1.msra.mxu0 0.0
    %151 = vmatprep.subr.mxu0 0.0
    %152 = vmatpush1.msra.mxu0 0.0
    %153 = vmatprep.subr.mxu0 0.0
    %154 = vmatpush1.msra.mxu0 0.0
    %155 = vmatprep.subr.mxu0 0.0
    %156 = vmatpush1.msra.mxu0 0.0
    %157 = vmatprep.subr.mxu0 0.0
    %158 = vmatpush1.msra.mxu0 0.0
    %159 = vmatprep.subr.mxu0 0.0
    %160 = vmatpush1.msra.mxu0 0.0
    %161 = vmatprep.subr.mxu0 0.0
    %162 = vmatpush1.msra.mxu0 0.0
    %163 = vmatprep.subr.mxu0 0.0
    %164 = vmatpush1.msra.mxu0 0.0
    %165 = vmatprep.subr.mxu0 0.0
    %166 = vmatpush1.msra.mxu0 0.0
    %167 = vmatprep.subr.mxu0 0.0
    %168 = vmatpush1.msra.mxu0 0.0
    %169 = vmatprep.subr.mxu0 0.0
    %170 = vmatpush1.msra.mxu0 0.0
    %171 = vmatprep.subr.mxu0 0.0
    %172 = vmatpush1.msra.mxu0 0.0
    %173 = vmatprep.subr.mxu0 0.0
    %174 = vmatpush1.msra.mxu0 0.0
    %175 = vmatprep.subr.mxu0 0.0
    %176 = vmatpush1.msra.mxu0 0.0
    %177 = vmatprep.subr.mxu0 0.0
    %178 = vmatpush1.msra.mxu0 0.0
    %179 = vmatprep.mubr.f32.mxu0 0.0
    %180 = vmatmul.mubr.f32.gmra.mrb[0].mxu0 %v113
    %v181 = vpop.f32.mrb[0].mxu0
    %v182 = vadd.f32 %v74, %v181
    %v183 = vpop.f32.mrb[0].mxu0
    %v184 = vadd.f32 %v78, %v183
    %185 = vdwg.mxu0
    %186 = vmatprep.subr.mxu0 %v56
    %187 = vmatpush1.msra.mxu0 %v55
    %188 = vmatprep.subr.mxu0 %v64
    %189 = vmatpush1.msra.mxu0 %v63
    %190 = vmatprep.subr.mxu0 0.0
    %191 = vmatpush1.msra.mxu0 0.0
    %192 = vmatprep.subr.mxu0 0.0
    %193 = vmatpush1.msra.mxu0 0.0
    %194 = vmatprep.subr.mxu0 0.0
    %195 = vmatpush1.msra.mxu0 0.0
    %196 = vmatprep.subr.mxu0 0.0
    %197 = vmatpush1.msra.mxu0 0.0
    %198 = vmatprep.subr.mxu0 0.0
    %199 = vmatpush1.msra.mxu0 0.0
    %200 = vmatprep.subr.mxu0 0.0
    %201 = vmatpush1.msra.mxu0 0.0
    %202 = vmatprep.subr.mxu0 0.0
    %203 = vmatpush1.msra.mxu0 0.0
    %204 = vmatprep.subr.mxu0 0.0
    %205 = vmatpush1.msra.mxu0 0.0
    %206 = vmatprep.subr.mxu0 0.0
    %207 = vmatpush1.msra.mxu0 0.0
    %208 = vmatprep.subr.mxu0 0.0
    %209 = vmatpush1.msra.mxu0 0.0
    %210 = vmatprep.subr.mxu0 0.0
    %211 = vmatpush1.msra.mxu0 0.0
    %212 = vmatprep.subr.mxu0 0.0
    %213 = vmatpush1.msra.mxu0 0.0
    %214 = vmatprep.subr.mxu0 0.0
    %215 = vmatpush1.msra.mxu0 0.0
    %216 = vmatprep.subr.mxu0 0.0
    %217 = vmatpush1.msra.mxu0 0.0
    %218 = vmatprep.subr.mxu0 0.0
    %219 = vmatpush1.msra.mxu0 0.0
    %220 = vmatprep.subr.mxu0 0.0
    %221 = vmatpush1.msra.mxu0 0.0
    %222 = vmatprep.subr.mxu0 0.0
    %223 = vmatpush1.msra.mxu0 0.0
    %224 = vmatprep.subr.mxu0 0.0
    %225 = vmatpush1.msra.mxu0 0.0
    %226 = vmatprep.subr.mxu0 0.0
    %227 = vmatpush1.msra.mxu0 0.0
    %228 = vmatprep.subr.mxu0 0.0
    %229 = vmatpush1.msra.mxu0 0.0
    %230 = vmatprep.subr.mxu0 0.0
    %231 = vmatpush1.msra.mxu0 0.0
    %232 = vmatprep.subr.mxu0 0.0
    %233 = vmatpush1.msra.mxu0 0.0
    %234 = vmatprep.subr.mxu0 0.0
    %235 = vmatpush1.msra.mxu0 0.0
    %236 = vmatprep.subr.mxu0 0.0
    %237 = vmatpush1.msra.mxu0 0.0
    %238 = vmatprep.subr.mxu0 0.0
    %239 = vmatpush1.msra.mxu0 0.0
    %240 = vmatprep.subr.mxu0 0.0
    %241 = vmatpush1.msra.mxu0 0.0
    %242 = vmatprep.subr.mxu0 0.0
    %243 = vmatpush1.msra.mxu0 0.0
    %244 = vmatprep.subr.mxu0 0.0
    %245 = vmatpush1.msra.mxu0 0.0
    %246 = vmatprep.subr.mxu0 0.0
    %247 = vmatpush1.msra.mxu0 0.0
    %248 = vmatprep.subr.mxu0 0.0
    %249 = vmatpush1.msra.mxu0 0.0
    %250 = vmatprep.mubr.f32.mxu0 0.0
    %251 = vmatmul.mubr.f32.gmra.mrb[0].mxu0 %v113
    %v252 = vpop.f32.mrb[0].mxu0
    %v253 = vadd.f32 %v82, %v252
    %v254 = vpop.f32.mrb[0].mxu0
    %v255 = vadd.f32 %v86, %v254
    %256 = vdwg.mxu0
    %257 = vmatprep.subr.mxu0 %v58
    %258 = vmatpush1.msra.mxu0 %v57
    %259 = vmatprep.subr.mxu0 %v66
    %260 = vmatpush1.msra.mxu0 %v65
    %261 = vmatprep.subr.mxu0 0.0
    %262 = vmatpush1.msra.mxu0 0.0
    %263 = vmatprep.subr.mxu0 0.0
    %264 = vmatpush1.msra.mxu0 0.0
    %265 = vmatprep.subr.mxu0 0.0
    %266 = vmatpush1.msra.mxu0 0.0
    %267 = vmatprep.subr.mxu0 0.0
    %268 = vmatpush1.msra.mxu0 0.0
    %269 = vmatprep.subr.mxu0 0.0
    %270 = vmatpush1.msra.mxu0 0.0
    %271 = vmatprep.subr.mxu0 0.0
    %272 = vmatpush1.msra.mxu0 0.0
    %273 = vmatprep.subr.mxu0 0.0
    %274 = vmatpush1.msra.mxu0 0.0
    %275 = vmatprep.subr.mxu0 0.0
    %276 = vmatpush1.msra.mxu0 0.0
    %277 = vmatprep.subr.mxu0 0.0
    %278 = vmatpush1.msra.mxu0 0.0
    %279 = vmatprep.subr.mxu0 0.0
    %280 = vmatpush1.msra.mxu0 0.0
    %281 = vmatprep.subr.mxu0 0.0
    %282 = vmatpush1.msra.mxu0 0.0
    %283 = vmatprep.subr.mxu0 0.0
    %284 = vmatpush1.msra.mxu0 0.0
    %285 = vmatprep.subr.mxu0 0.0
    %286 = vmatpush1.msra.mxu0 0.0
    %287 = vmatprep.subr.mxu0 0.0
    %288 = vmatpush1.msra.mxu0 0.0
    %289 = vmatprep.subr.mxu0 0.0
    %290 = vmatpush1.msra.mxu0 0.0
    %291 = vmatprep.subr.mxu0 0.0
    %292 = vmatpush1.msra.mxu0 0.0
    %293 = vmatprep.subr.mxu0 0.0
    %294 = vmatpush1.msra.mxu0 0.0
    %295 = vmatprep.subr.mxu0 0.0
    %296 = vmatpush1.msra.mxu0 0.0
    %297 = vmatprep.subr.mxu0 0.0
    %298 = vmatpush1.msra.mxu0 0.0
    %299 = vmatprep.subr.mxu0 0.0
    %300 = vmatpush1.msra.mxu0 0.0
    %301 = vmatprep.subr.mxu0 0.0
    %302 = vmatpush1.msra.mxu0 0.0
    %303 = vmatprep.subr.mxu0 0.0
    %304 = vmatpush1.msra.mxu0 0.0
    %305 = vmatprep.subr.mxu0 0.0
    %306 = vmatpush1.msra.mxu0 0.0
    %307 = vmatprep.subr.mxu0 0.0
    %308 = vmatpush1.msra.mxu0 0.0
    %309 = vmatprep.subr.mxu0 0.0
    %310 = vmatpush1.msra.mxu0 0.0
    %311 = vmatprep.subr.mxu0 0.0
    %312 = vmatpush1.msra.mxu0 0.0
    %313 = vmatprep.subr.mxu0 0.0
    %314 = vmatpush1.msra.mxu0 0.0
    %315 = vmatprep.subr.mxu0 0.0
    %316 = vmatpush1.msra.mxu0 0.0
    %317 = vmatprep.subr.mxu0 0.0
    %318 = vmatpush1.msra.mxu0 0.0
    %319 = vmatprep.subr.mxu0 0.0
    %320 = vmatpush1.msra.mxu0 0.0
    %321 = vmatprep.mubr.f32.mxu0 0.0
    %322 = vmatmul.mubr.f32.gmra.mrb[0].mxu0 %v113
    %v323 = vpop.f32.mrb[0].mxu0
    %v324 = vadd.f32 %v90, %v323
    %v325 = vpop.f32.mrb[0].mxu0
    %v326 = vadd.f32 %v94, %v325
    %327 = vdwg.mxu0
    %328 = vmatprep.subr.mxu0 %v60
    %329 = vmatpush1.msra.mxu0 %v59
    %330 = vmatprep.subr.mxu0 %v68
    %331 = vmatpush1.msra.mxu0 %v67
    %332 = vmatprep.subr.mxu0 0.0
    %333 = vmatpush1.msra.mxu0 0.0
    %334 = vmatprep.subr.mxu0 0.0
    %335 = vmatpush1.msra.mxu0 0.0
    %336 = vmatprep.subr.mxu0 0.0
    %337 = vmatpush1.msra.mxu0 0.0
    %338 = vmatprep.subr.mxu0 0.0
    %339 = vmatpush1.msra.mxu0 0.0
    %340 = vmatprep.subr.mxu0 0.0
    %341 = vmatpush1.msra.mxu0 0.0
    %342 = vmatprep.subr.mxu0 0.0
    %343 = vmatpush1.msra.mxu0 0.0
    %344 = vmatprep.subr.mxu0 0.0
    %345 = vmatpush1.msra.mxu0 0.0
    %346 = vmatprep.subr.mxu0 0.0
    %347 = vmatpush1.msra.mxu0 0.0
    %348 = vmatprep.subr.mxu0 0.0
    %349 = vmatpush1.msra.mxu0 0.0
    %350 = vmatprep.subr.mxu0 0.0
    %351 = vmatpush1.msra.mxu0 0.0
    %352 = vmatprep.subr.mxu0 0.0
    %353 = vmatpush1.msra.mxu0 0.0
    %354 = vmatprep.subr.mxu0 0.0
    %355 = vmatpush1.msra.mxu0 0.0
    %356 = vmatprep.subr.mxu0 0.0
    %357 = vmatpush1.msra.mxu0 0.0
    %358 = vmatprep.subr.mxu0 0.0
    %359 = vmatpush1.msra.mxu0 0.0
    %360 = vmatprep.subr.mxu0 0.0
    %361 = vmatpush1.msra.mxu0 0.0
    %362 = vmatprep.subr.mxu0 0.0
    %363 = vmatpush1.msra.mxu0 0.0
    %364 = vmatprep.subr.mxu0 0.0
    %365 = vmatpush1.msra.mxu0 0.0
    %366 = vmatprep.subr.mxu0 0.0
    %367 = vmatpush1.msra.mxu0 0.0
    %368 = vmatprep.subr.mxu0 0.0
    %369 = vmatpush1.msra.mxu0 0.0
    %370 = vmatprep.subr.mxu0 0.0
    %371 = vmatpush1.msra.mxu0 0.0
    %372 = vmatprep.subr.mxu0 0.0
    %373 = vmatpush1.msra.mxu0 0.0
    %374 = vmatprep.subr.mxu0 0.0
    %375 = vmatpush1.msra.mxu0 0.0
    %376 = vmatprep.subr.mxu0 0.0
    %377 = vmatpush1.msra.mxu0 0.0
    %378 = vmatprep.subr.mxu0 0.0
    %379 = vmatpush1.msra.mxu0 0.0
    %380 = vmatprep.subr.mxu0 0.0
    %381 = vmatpush1.msra.mxu0 0.0
    %382 = vmatprep.subr.mxu0 0.0
    %383 = vmatpush1.msra.mxu0 0.0
    %384 = vmatprep.subr.mxu0 0.0
    %385 = vmatpush1.msra.mxu0 0.0
    %386 = vmatprep.subr.mxu0 0.0
    %387 = vmatpush1.msra.mxu0 0.0
    %388 = vmatprep.subr.mxu0 0.0
    %389 = vmatpush1.msra.mxu0 0.0
    %390 = vmatprep.subr.mxu0 0.0
    %391 = vmatpush1.msra.mxu0 0.0
    %392 = vmatprep.mubr.f32.mxu0 0.0
    %393 = vmatmul.mubr.f32.gmra.mrb[0].mxu0 %v113
    %v394 = vpop.f32.mrb[0].mxu0
    %v395 = vadd.f32 %v98, %v394
    %v396 = vpop.f32.mrb[0].mxu0
    %v397 = vadd.f32 %v102, %v396
    %398 = vdwg.mxu0
    %v399 = vtanh.pop %v182
    %v400 = vtanh.pop %v184
    %v401 = vtanh.pop %v253
    %v402 = vtanh.pop %v255
    %v403 = vtanh.pop %v324
    %v404 = vtanh.pop %v326
    %v405 = vtanh.pop %v395
    %v406 = vtanh.pop %v397
    %v407 = vpack.c.bf16 %v399, %v399
    %v408 = vpack.c.bf16 %v400, %v400
    %v409 = vpack.c.bf16 %v401, %v401
    %v410 = vpack.c.bf16 %v402, %v402
    %v411 = vpack.c.bf16 %v403, %v403
    %v412 = vpack.c.bf16 %v404, %v404
    %v413 = vpack.c.bf16 %v405, %v405
    %v414 = vpack.c.bf16 %v406, %v406
    %v423 = vunpack.c.l.b16 %v407
    %v424 = vunpack.c.l.b16 %v408
    %v425 = vunpack.c.l.b16 %v409
    %v426 = vunpack.c.l.b16 %v410
    %v427 = vunpack.c.l.b16 %v411
    %v428 = vunpack.c.l.b16 %v412
    %v429 = vunpack.c.l.b16 %v413
    %v430 = vunpack.c.l.b16 %v414
    %v431 = vpack.c.b16 %v424, %v423
    %v432 = vpack.c.b16 %v426, %v425
    %v433 = vpack.c.b16 %v428, %v427
    %v434 = vpack.c.b16 %v430, %v429
    %439 = vst [vmem:[#allocation8] sm:$0xff] %v431
    %440 = vst [vmem:[#allocation8 + $0x8] sm:$0xff] %v432
    %441 = vst [vmem:[#allocation8 + $0x10] sm:$0xff] %v433
    %442 = vst [vmem:[#allocation8 + $0x18] sm:$0xff] %v434
    // Predicated region
    $region26: #{tpu_custom_call.1} parent=1 // pred_check
      _
    $region27: #{tpu_custom_call.1} parent=1 // pred_check_branch
      %444 = sbr.rel (0) target = $region29
    $region28: #{tpu_custom_call.1} parent=1 // pred_region
      %s446 = ssub.s32 512, 512
      %447 = vsyncadd [#allocation4], %s446
      %s449 = sshll.u32 [#allocation8], 4
      %s450 = int_to_ptr.vmem [resolvable:$true] %s449
      %452 = dma.vmem_to_hbm [thread:$0]  %s450, 512, %s3, [#allocation4]
    $region29: #{tpu_custom_call.1} parent=1 // pred_fallthru
      _
    // Predicated region
    $region30: #{tpu_custom_call.1} parent=1 // pred_check
      _
    $region31: #{tpu_custom_call.1} parent=1 // pred_check_branch
      %454 = sbr.rel (0) target = $region33
    $region32: #{tpu_custom_call.1} parent=1 // pred_region
      %455 = dma.done [#allocation4], 512
    $region33: #{tpu_custom_call.1} parent=1 // pred_fallthru
      _
    %456 = vsyncpa [#allocation3], 1
    %457 = vsyncpa [#allocation6], 1
    %458 = vsyncpa [#allocation4], 1

</llo_original>
